<compile_context>
chip_gen: v7x
topology: tpu7x:2x2x1
jax: 0.10.0
libtpu: 0.0.40
codegen_flags: <defaults>
</compile_context>

<pallas_src>
import functools

import jax
import jax.numpy as jnp
from jax.experimental import pallas as pl
from jax.experimental.pallas import tpu as pltpu


def _rmsnorm_kernel(x_ref, w_ref, o_ref, *, eps: float, inv_dim: float):
    # x_ref: (tile_rows, dim), w_ref: (1, dim) already in output dtype,
    # o_ref: (tile_rows, dim)
    x = x_ref[...].astype(jnp.float32)
    ms = jnp.sum(x * x, axis=-1, keepdims=True) * inv_dim
    # cast back to input dtype first (torch: .type_as(x)), then apply weight
    normed = (x * jax.lax.rsqrt(ms + eps)).astype(o_ref.dtype)
    o_ref[...] = normed * w_ref[...]


def _rmsnorm_kernel_noweight(x_ref, o_ref, *, eps: float, inv_dim: float):
    # elementwise_affine=False variant: no weight input, no extra multiply.
    x = x_ref[...].astype(jnp.float32)
    ms = jnp.sum(x * x, axis=-1, keepdims=True) * inv_dim
    o_ref[...] = (x * jax.lax.rsqrt(ms + eps)).astype(o_ref.dtype)


def _chip_profile():
    """Generation-aware tuning knobs (safe defaults if probe fails)."""
    kind = ""
    try:
        kind = jax.devices()[0].device_kind.lower()
    except Exception:
        pass
    if "v7" in kind or "tpu7" in kind:
        # 2 TensorCores, 64 MiB VMEM, ~3.2 TB/s HBM per TC.
        return dict(multi_tc=True, target_bytes=5 << 20, vmem_cap=48 << 20)
    if "v6" in kind or "tpu6" in kind:
        # 1 TC, 128 MiB VMEM, ~1.4 TB/s.
        return dict(multi_tc=False, target_bytes=4 << 20, vmem_cap=64 << 20)
    if "v5" in kind or "tpu5" in kind:
        # 1 TC, 128 MiB VMEM, ~0.8 TB/s; scoped-VMEM default is only 16 MiB.
        return dict(multi_tc=False, target_bytes=2 << 20, vmem_cap=64 << 20)
    # Unknown chip: conservative.
    return dict(multi_tc=False, target_bytes=2 << 20, vmem_cap=32 << 20)


def _choose_tile_rows(rows: int, dim: int, itemsize: int, prof: dict) -> int:
    """Pick a row-tile size ~target_bytes per input block, (8,128)-aligned."""
    sublane = max(8, 32 // itemsize)  # 8 for f32, 16 for bf16, 32 for int8
    if rows < sublane:
        # single block equal to the full array (allowed by Pallas)
        return rows
    t = max(1, prof["target_bytes"] // (dim * itemsize))
    # Minimum grid steps: 8 on v7x (megacore sharding across 2 TCs),
    # 4 on single-TC chips (just enough pipeline stages for overlap).
    min_steps = 8 if prof["multi_tc"] else 4
    if rows > min_steps * sublane:
        t = min(t, pl.cdiv(rows, min_steps))
    t = max(sublane, (t // sublane) * sublane)     # sublane-aligned
    t = min(t, (rows // sublane) * sublane)        # never exceed the array
    if prof["multi_tc"]:
        # Prefer an even number of grid steps so neither TC idles on the tail.
        steps = pl.cdiv(rows, t)
        if steps > 1 and steps % 2 == 1:
            t2 = pl.cdiv(pl.cdiv(rows, steps + 1), sublane) * sublane
            t2 = max(sublane, min(t2, t))
            if pl.cdiv(rows, t2) % 2 == 0:
                t = t2
    return t


def rmsnorm(x: jax.Array, weight: jax.Array | None, eps: float = 1e-6,
            tile_rows: int | None = None) -> jax.Array:
    """RMSNorm over the last dimension of x.

    x: (..., dim); weight: (dim,) or None (elementwise_affine=False).
    """
    orig_shape = x.shape
    dim = orig_shape[-1]
    x2d = x.reshape(-1, dim)           # free reshape, no HBM copy
    rows = x2d.shape[0]
    dtype = x.dtype
    itemsize = jnp.dtype(dtype).itemsize

    # Lane-density guard: pad the feature axis to a multiple of 128 so the
    # output block is never lane-narrow (masked partial stores). Padded lanes
    # are zero, so the squared-sum is unchanged; inv_dim uses the true dim.
    pad_dim = 0
    if dim % 128 != 0:
        pad_dim = 128 * pl.cdiv(dim, 128) - dim
        x2d = jnp.pad(x2d, ((0, 0), (0, pad_dim)))
    dim_p = dim + pad_dim

    prof = _chip_profile()
    if tile_rows is None:
        tile_rows = _choose_tile_rows(rows, dim_p, itemsize, prof)
    tile_rows = max(1, min(tile_rows, rows))

    grid = (pl.cdiv(rows, tile_rows),)   # ragged last block handled by Pallas

    # VMEM budget: in + out, double-buffered (~4x block) + headroom.
    block_bytes = tile_rows * dim_p * itemsize
    vmem_limit = int(min(prof["vmem_cap"], max(32 << 20, 5 * block_bytes)))

    cost = pl.CostEstimate(
        flops=3 * rows * dim,
        transcendentals=rows,
        bytes_accessed=(2 * rows * dim_p + (0 if weight is None else dim_p)) * itemsize,
    )

    common = dict(
        out_shape=jax.ShapeDtypeStruct((rows, dim_p), dtype),
        compiler_params=pltpu.CompilerParams(
            dimension_semantics=("parallel",),
            vmem_limit_bytes=vmem_limit,
        ),
        cost_estimate=cost,
    )

    if weight is None:
        out = pl.pallas_call(
            functools.partial(_rmsnorm_kernel_noweight, eps=eps, inv_dim=1.0 / dim),
            grid_spec=pltpu.PrefetchScalarGridSpec(
                num_scalar_prefetch=0,
                grid=grid,
                in_specs=[pl.BlockSpec((tile_rows, dim_p), lambda i: (i, 0))],
                out_specs=pl.BlockSpec((tile_rows, dim_p), lambda i: (i, 0)),
            ),
            **common,
        )(x2d)
    else:
        # hoist the cast out of the kernel (applied once here, not per tile)
        w2d = weight.astype(dtype).reshape(1, dim)
        if pad_dim:
            w2d = jnp.pad(w2d, ((0, 0), (0, pad_dim)))
        out = pl.pallas_call(
            functools.partial(_rmsnorm_kernel, eps=eps, inv_dim=1.0 / dim),
            grid_spec=pltpu.PrefetchScalarGridSpec(
                num_scalar_prefetch=0,
                grid=grid,
                in_specs=[
                    pl.BlockSpec((tile_rows, dim_p), lambda i: (i, 0)),
                    pl.BlockSpec((1, dim_p), lambda i: (0, 0)),
                ],
                out_specs=pl.BlockSpec((tile_rows, dim_p), lambda i: (i, 0)),
            ),
            **common,
        )(x2d, w2d)

    if pad_dim:
        out = out[:, :dim]
    return out.reshape(orig_shape)


def rmsnorm_ref(x, weight, eps=1e-6):
    xf = x.astype(jnp.float32)
    normed = xf * jax.lax.rsqrt(jnp.mean(xf * xf, axis=-1, keepdims=True) + eps)
    out = normed.astype(x.dtype)
    if weight is not None:
        out = out * weight.astype(x.dtype)
    return out


if __name__ == "__main__":
    key = jax.random.PRNGKey(0)

    # main test (matches module usage): batch=2, seq=8, dim=128, f32
    batch, seq, dim = 2, 8, 128
    x = jax.random.normal(key, (batch, seq, dim), dtype=jnp.float32)
    weight = jnp.ones((dim,), dtype=jnp.float32)  # module init: ones(dim)

    out = rmsnorm(x, weight, eps=1e-6)
    out = jax.block_until_ready(out)
    ref = rmsnorm_ref(x, weight, eps=1e-6)
    assert out.shape == x.shape and out.dtype == x.dtype
    assert jnp.allclose(out, ref, atol=1e-5, rtol=1e-5)

    # ragged-row test (rows = 3*5 = 15, not a multiple of 8) — exercises the
    # no-pad / partial-last-block path.
    x2 = jax.random.normal(jax.random.PRNGKey(1), (3, 5, dim), dtype=jnp.float32)
    w2 = jax.random.normal(jax.random.PRNGKey(2), (dim,), dtype=jnp.float32)
    out2 = jax.block_until_ready(rmsnorm(x2, w2, eps=1e-6))
    assert jnp.allclose(out2, rmsnorm_ref(x2, w2, eps=1e-6), atol=1e-5, rtol=1e-5)

    # elementwise_affine=False path (no weight input / no multiply).
    out3 = jax.block_until_ready(rmsnorm(x, None, eps=1e-6))
    assert jnp.allclose(out3, rmsnorm_ref(x, None, eps=1e-6), atol=1e-5, rtol=1e-5)

    # non-128-multiple feature dim — exercises the lane-padding guard path.
    x4 = jax.random.normal(jax.random.PRNGKey(3), (2, 7, 100), dtype=jnp.float32)
    w4 = jax.random.normal(jax.random.PRNGKey(4), (100,), dtype=jnp.float32)
    out4 = jax.block_until_ready(rmsnorm(x4, w4, eps=1e-6))
    assert jnp.allclose(out4, rmsnorm_ref(x4, w4, eps=1e-6), atol=1e-5, rtol=1e-5)

    print("KERNEL_OK")
</pallas_src>

<mosaic_0001>
module attributes {stable_mosaic.version = 11 : i64} {
  func.func @_rmsnorm_kernel(%arg0: i32, %arg1: memref<16x128xf32, #tpu.memory_space<vmem>>, %arg2: memref<1x128xf32, #tpu.memory_space<vmem>>, %arg3: memref<16x128xf32, #tpu.memory_space<vmem>>) attributes {dimension_semantics = [#tpu.dimension_semantics<parallel>], iteration_bounds = array<i64: 1>, scalar_prefetch = 0 : i64, scratch_operands = 0 : i64, tpu.core_type = #tpu.core_type<tc>, window_params = [{transform_indices = @transform_0, window_bounds = array<i64: 16, 128>}, {pipeline_mode = #tpu.pipeline_mode<synchronous>, transform_indices = @transform_1, window_bounds = array<i64: 1, 128>}, {transform_indices = @transform_2, window_bounds = array<i64: 16, 128>}]} {
    %c0 = arith.constant 0 : index
    %c0_0 = arith.constant 0 : index
    %0 = vector.load %arg1[%c0, %c0_0] : memref<16x128xf32, #tpu.memory_space<vmem>>, vector<16x128xf32>
    %1 = arith.mulf %0, %0 : vector<16x128xf32>
    %cst = arith.constant dense<0.000000e+00> : vector<16xf32>
    %2 = vector.multi_reduction <add>, %1, %cst [1] : vector<16x128xf32> to vector<16xf32>
    %3 = vector.shape_cast %2 : vector<16xf32> to vector<16x1xf32>
    %cst_1 = arith.constant 7.812500e-03 : f32
    %4 = vector.broadcast %cst_1 : f32 to vector<16x1xf32>
    %5 = arith.mulf %3, %4 : vector<16x1xf32>
    %cst_2 = arith.constant 9.99999997E-7 : f32
    %6 = vector.broadcast %cst_2 : f32 to vector<16x1xf32>
    %7 = arith.addf %5, %6 : vector<16x1xf32>
    %8 = math.rsqrt %7 : vector<16x1xf32>
    %9 = vector.broadcast %8 : vector<16x1xf32> to vector<16x128xf32>
    %10 = arith.mulf %0, %9 : vector<16x128xf32>
    %c0_3 = arith.constant 0 : index
    %c0_4 = arith.constant 0 : index
    %11 = vector.load %arg2[%c0_3, %c0_4] : memref<1x128xf32, #tpu.memory_space<vmem>>, vector<1x128xf32>
    %12 = vector.broadcast %11 : vector<1x128xf32> to vector<16x128xf32>
    %13 = arith.mulf %10, %12 : vector<16x128xf32>
    %c0_5 = arith.constant 0 : index
    %c0_6 = arith.constant 0 : index
    %14 = vector.load %arg3[%c0_5, %c0_6] : memref<16x128xf32, #tpu.memory_space<vmem>>, vector<16x128xf32>
    tpu.vector_store %arg3[%c0_5, %c0_6], %13 {strides = array<i32>} : memref<16x128xf32, #tpu.memory_space<vmem>>, vector<16x128xf32>,
    return
  }
  func.func @transform_0(%arg0: i32) -> (i32, i32) {
    %c0_i32 = arith.constant 0 : i32
    %c0_i32_0 = arith.constant 0 : i32
    return %arg0, %c0_i32 : i32, i32
  }
  func.func @transform_1(%arg0: i32) -> (i32, i32) {
    %c0_i32 = arith.constant 0 : i32
    %c0_i32_0 = arith.constant 0 : i32
    %c0_i32_1 = arith.constant 0 : i32
    return %c0_i32, %c0_i32_0 : i32, i32
  }
  func.func @transform_2(%arg0: i32) -> (i32, i32) {
    %c0_i32 = arith.constant 0 : i32
    %c0_i32_0 = arith.constant 0 : i32
    return %arg0, %c0_i32 : i32, i32
  }
}

</mosaic_0001>

<llo_original>
// kernel: tpu_custom_call.1
$region0: #{tpu_custom_call.1}
  #allocation0 [shape = 'u32[]', space=smem, size = 0x4, offset = 0x4, fixed_abs, tag = 'smem constant byte address 0x4 - core index']
  #allocation1 [shape = 'u32[144,128]{1,0:T(1,128)}', space=vmem, size = 0x12000, scoped, tag = 'internal scratch']
  %s0 = inlined_call_operand.hbm [shape: f32[16,128], index: 0, kind: input, shape index: {}]
  %s1 = inlined_call_operand.vmem [shape: f32[1,128], index: 1, kind: input, shape index: {}]
  %s2 = inlined_call_operand.hbm [shape: f32[16,128], index: 2, kind: output, shape index: {}]
  %s3 = sld [smem:[#allocation0]]
  $region22: #{tpu_custom_call.1} parent=0
    _
  %s5 = ssub.s32 1, %s3
  %s6 = scalar_select 0, %s5, %s3
  $region1: #{tpu_custom_call.1} parent=0
    #allocation2 [shape = 'u8[8192]{0}', space=vmem, size = 0x2000, scoped, tag = 'input window, operand 0, single buffered']
    #allocation3 [shape = 's32[1]{0}', space=sflag, size = 0x4, scoped, tag = 'scoped memory for tpu_custom_call.1']
    #allocation4 [shape = 's32[1]{0}', space=sflag, size = 0x4, scoped, tag = 'scoped memory for tpu_custom_call.1']
    #allocation5 [shape = 'u8[8192]{0}', space=vmem, size = 0x2000, scoped, tag = 'output window, operand 0, single buffered']
    %7 = vsyncpa [#allocation3], 0
    %8 = vsyncpa [#allocation4], 0
    // Predicated region
    $region2: #{tpu_custom_call.1} parent=1 // pred_check
      _
    $region3: #{tpu_custom_call.1} parent=1 // pred_check_branch
      %10 = sbr.rel (0) target = $region5
    $region4: #{tpu_custom_call.1} parent=1 // pred_region
      %s12 = ssub.s32 256, 256
      %13 = vsyncadd [#allocation3], %s12
      %s14 = sshll.u32 [#allocation2], 4
      %s15 = int_to_ptr.vmem [resolvable:$true] %s14
      %20 = dma.hbm_to_vmem [thread:$0]  %s0, 256, %s15, [#allocation3], 128, 128, 8
    $region5: #{tpu_custom_call.1} parent=1 // pred_fallthru
      _
    // Predicated region
    $region6: #{tpu_custom_call.1} parent=1 // pred_check
      _
    $region7: #{tpu_custom_call.1} parent=1 // pred_check_branch
      %22 = sbr.rel (0) target = $region9
    $region8: #{tpu_custom_call.1} parent=1 // pred_region
      _
    $region9: #{tpu_custom_call.1} parent=1 // pred_fallthru
      _
    // Predicated region
    $region10: #{tpu_custom_call.1} parent=1 // pred_check
      _
    $region11: #{tpu_custom_call.1} parent=1 // pred_check_branch
      %24 = sbr.rel (0) target = $region13
    $region12: #{tpu_custom_call.1} parent=1 // pred_region
      %25 = dma.done [#allocation3], 256
    $region13: #{tpu_custom_call.1} parent=1 // pred_fallthru
      _
    %v26 = vld [vmem:[#allocation2] sm:$0xff]
    %v27 = vld [vmem:[#allocation2 + $0x8] sm:$0xff]
    %v28 = vmul.f32 %v26, %v26
    %v29 = vmul.f32 %v27, %v27
    %30 = vadd.xlane.f32.xlu0 %v28
    %v31 = vpop.xlane.xlu0 %30
    %32 = vadd.xlane.f32.xlu0 %v29
    %v33 = vpop.xlane.xlu0 %32
    %v34 = vmul.f32 %v31, 0.0078125
    %v35 = vmul.f32 %v33, 0.0078125
    %v36 = vadd.f32 %v34, 1e-06
    %v37 = vadd.f32 %v35, 1e-06
    %v38 = vrsqrt.pop %v36
    %v39 = vrsqrt.pop %v37
    %v40 = vmul.f32 %v26, %v38
    %v41 = vmul.f32 %v27, %v39
    %v42 = vld [vmem:[%s1] sm:$0x1]
    %v44 = vlaneseq
    %v45 = vshrl.u32 %v44, 7
    %v46 = vsub.s32 0, %v45
    %v47 = vrot.slane %v42, %v46
    %v49 = vmul.f32 %v40, %v47
    %v50 = vmul.f32 %v41, %v47
    %51 = vst [vmem:[#allocation5] sm:$0xff] %v49
    %52 = vst [vmem:[#allocation5 + $0x8] sm:$0xff] %v50
    // Predicated region
    $region14: #{tpu_custom_call.1} parent=1 // pred_check
      _
    $region15: #{tpu_custom_call.1} parent=1 // pred_check_branch
      %54 = sbr.rel (0) target = $region17
    $region16: #{tpu_custom_call.1} parent=1 // pred_region
      %s56 = ssub.s32 256, 256
      %57 = vsyncadd [#allocation4], %s56
      %s58 = sshll.u32 [#allocation5], 4
      %s59 = int_to_ptr.vmem [resolvable:$true] %s58
      %64 = dma.vmem_to_hbm [thread:$0]  %s59, 256, %s2, [#allocation4], 128, 128, 8
    $region17: #{tpu_custom_call.1} parent=1 // pred_fallthru
      _
    // Predicated region
    $region18: #{tpu_custom_call.1} parent=1 // pred_check
      _
    $region19: #{tpu_custom_call.1} parent=1 // pred_check_branch
      %66 = sbr.rel (0) target = $region21
    $region20: #{tpu_custom_call.1} parent=1 // pred_region
      %67 = dma.done [#allocation4], 256
    $region21: #{tpu_custom_call.1} parent=1 // pred_fallthru
      _
    %68 = vsyncpa [#allocation3], 1
    %69 = vsyncpa [#allocation4], 1

</llo_original>
